<compile_context>
chip_gen: v7x
topology: tpu7x:2x2x1
jax: 0.10.0
libtpu: 0.0.40
codegen_flags: <defaults>
</compile_context>

<pallas_src>
import functools
import math

import jax
import jax.numpy as jnp
from jax import lax
from jax.experimental import pallas as pl
from jax.experimental.pallas import tpu as pltpu


def attention_kernel(v_ref, k_ref, q_ref,
                     wk_ref, bk_ref, wq_ref, bq_ref, wo_ref, bo_ref,
                     out_ref, *, n_heads, proj_d_head, dim_out):
    f32 = jnp.float32
    bf16 = jnp.bfloat16
    inv_scale = 1.0 / math.sqrt(proj_d_head)

    v = v_ref[0]   # (Nv, dim_k)  bf16
    k = k_ref[0]   # (Nv, dim_k)  bf16
    q = q_ref[0]   # (Nq, dim_q)  bf16

    # Fused multi-head projections: single wide MXU matmuls, f32 accumulate.
    kp = jnp.dot(k, wk_ref[...], preferred_element_type=f32) + bk_ref[...]   # (Nv, H*pd)
    qp = jnp.dot(q, wq_ref[...], preferred_element_type=f32) + bq_ref[...]   # (Nq, H*pd)
    # Scale applied once to the thin qp slab (Nq x H*pd), not per-head energies.
    qp = qp * inv_scale

    # Fused V @ [Wo_0 | ... | Wo_{H-1}]  -> (Nv, H*dim_out); fc_out is
    # distributed over heads, so no lane-wise concat is ever needed.
    vo = jnp.dot(v, wo_ref[...], preferred_element_type=f32)

    kp_b = kp.astype(bf16)
    qp_b = qp.astype(bf16)
    vo_b = vo.astype(bf16)

    # Per-head energies via static lane slices of the fused projections.
    e = []
    for h in range(n_heads):
        qh = qp_b[:, h * proj_d_head:(h + 1) * proj_d_head]
        kh = kp_b[:, h * proj_d_head:(h + 1) * proj_d_head]
        e.append(lax.dot_general(qh, kh, (((1,), (1,)), ((), ())),
                                 preferred_element_type=f32))        # (Nq, Nv)

    # Softmax over the HEADS axis (torch: softmax(..., dim=2)) — pointwise in
    # (q, k), so it is plain elementwise VPU work over H small matrices.
    m = e[0]
    for h in range(1, n_heads):
        m = jnp.maximum(m, e[h])
    denom = None
    for h in range(n_heads):
        e[h] = jnp.exp(e[h] - m)          # overwrite: energies & exps never both live
        denom = e[h] if denom is None else denom + e[h]
    inv_denom = pl.reciprocal(denom, approx=True)   # EUP slot, ~free

    # out = sum_h attn_h @ (V @ Wo_h) + b_out, then ReLU.
    out = None
    for h in range(n_heads):
        a_h = (e[h] * inv_denom).astype(bf16)
        voh = vo_b[:, h * dim_out:(h + 1) * dim_out]
        contrib = jnp.dot(a_h, voh, preferred_element_type=f32)      # (Nq, dim_out)
        out = contrib if out is None else out + contrib

    out = out + bo_ref[...]
    out_ref[0] = jnp.maximum(out, 0.0).astype(out_ref.dtype)


def attention_forward(values, keys, queries, params, n_heads):
    wk, bk, wq, bq, wo, bo = params
    B, Nv, dim_k = values.shape
    _, Nq, dim_q = queries.shape
    proj_total = wk.shape[1]
    pd = proj_total // n_heads
    dim_out = wo.shape[1]

    bf16 = jnp.bfloat16
    # bf16 activations / weights at the pallas_call boundary: halves DMA bytes
    # and feeds the MXU its native dtype (all accumulation stays f32).
    values_b = values.astype(bf16)
    keys_b = keys.astype(bf16)
    queries_b = queries.astype(bf16)
    wk_b = wk.astype(bf16)
    wq_b = wq.astype(bf16)
    # Head-distributed fc_out: (H*dim_k, dim_out) -> (dim_k, H*dim_out) so that
    # v @ wo_all = [V@Wo_0 | ... | V@Wo_{H-1}] in one wide matmul.
    wo_all = (wo.reshape(n_heads, dim_k, dim_out)
                .transpose(1, 0, 2)
                .reshape(dim_k, n_heads * dim_out)).astype(bf16)

    kernel = functools.partial(attention_kernel, n_heads=n_heads,
                               proj_d_head=pd, dim_out=dim_out)

    in_specs = [
        pl.BlockSpec((1, Nv, dim_k), lambda i: (i, 0, 0)),              # values
        pl.BlockSpec((1, Nv, dim_k), lambda i: (i, 0, 0)),              # keys
        pl.BlockSpec((1, Nq, dim_q), lambda i: (i, 0, 0)),              # queries
        pl.BlockSpec((dim_k, proj_total), lambda i: (0, 0)),            # W_k (fused heads)
        pl.BlockSpec((1, proj_total), lambda i: (0, 0)),                # b_k
        pl.BlockSpec((dim_q, proj_total), lambda i: (0, 0)),            # W_q (fused heads)
        pl.BlockSpec((1, proj_total), lambda i: (0, 0)),                # b_q
        pl.BlockSpec((dim_k, n_heads * dim_out), lambda i: (0, 0)),     # W_out (head-major lanes)
        pl.BlockSpec((1, dim_out), lambda i: (0, 0)),                   # b_out
    ]
    out_specs = pl.BlockSpec((1, Nq, dim_out), lambda i: (i, 0, 0))

    out = pl.pallas_call(
        kernel,
        out_shape=jax.ShapeDtypeStruct((B, Nq, dim_out), jnp.float32),
        grid=(B,),                               # grid >= 2: pipelining + v7x megacore
        in_specs=in_specs,
        out_specs=out_specs,
        compiler_params=pltpu.CompilerParams(
            dimension_semantics=("parallel",)),  # no carried state across batch
    )(values_b, keys_b, queries_b, wk_b, bk, wq_b, bq, wo_all, bo)

    return out


def reference_forward(values, keys, queries, params, n_heads):
    """Pure-JAX f32 reference mirroring the PyTorch forward exactly."""
    wk, bk, wq, bq, wo, bo = params
    B, Nv, _ = values.shape
    Nq = queries.shape[1]
    proj_total = wk.shape[1]
    pd = proj_total // n_heads
    kp = (keys @ wk + bk).reshape(B, Nv, n_heads, pd)
    qp = (queries @ wq + bq).reshape(B, Nq, n_heads, pd)
    vp = jnp.repeat(values[:, :, None, :], n_heads, axis=2)
    energy = jnp.einsum('nqhd,nkhd->nqhk', qp, kp)
    attn = jax.nn.softmax(energy / pd ** 0.5, axis=2)   # softmax over heads (dim=2)
    out = jnp.einsum('nqhk,nkhd->nqhd', attn, vp)
    out = out.reshape(B, Nq, -1)
    return jnp.maximum(out @ wo + bo, 0.0)


if __name__ == "__main__":
    # Small shapes consistent with the module.
    B, Nv, Nq = 2, 8, 8
    dim_q, dim_k, dim_out = 32, 16, 32
    n_heads = 3
    proj_d_total = 48   # per-head proj_d = 16

    key = jax.random.PRNGKey(0)
    ks = jax.random.split(key, 9)
    values = jax.random.normal(ks[0], (B, Nv, dim_k), jnp.float32)
    keys_in = jax.random.normal(ks[1], (B, Nv, dim_k), jnp.float32)
    queries = jax.random.normal(ks[2], (B, Nq, dim_q), jnp.float32)

    # Deterministic synthetic parameters (Linear weights stored as (in, out)).
    wk = jax.random.normal(ks[3], (dim_k, proj_d_total), jnp.float32) * 0.1
    bk = jax.random.normal(ks[4], (1, proj_d_total), jnp.float32) * 0.1
    wq = jax.random.normal(ks[5], (dim_q, proj_d_total), jnp.float32) * 0.1
    bq = jax.random.normal(ks[6], (1, proj_d_total), jnp.float32) * 0.1
    wo = jax.random.normal(ks[7], (dim_k * n_heads, dim_out), jnp.float32) * 0.1
    bo = jax.random.normal(ks[8], (1, dim_out), jnp.float32) * 0.1
    params = (wk, bk, wq, bq, wo, bo)

    out = attention_forward(values, keys_in, queries, params, n_heads)
    out = jax.block_until_ready(out)

    ref = reference_forward(values, keys_in, queries, params, n_heads)
    assert out.shape == (B, Nq, dim_out)
    # Tolerance accommodates bf16 MXU inputs + EUP approx reciprocal vs f32 ref.
    max_diff = jnp.max(jnp.abs(out - ref))
    assert jnp.allclose(out, ref, atol=3e-2, rtol=3e-2), (
        f"mismatch vs reference (max abs diff {max_diff})")

    print("KERNEL_OK")
</pallas_src>

<mosaic_0001>
module attributes {stable_mosaic.version = 11 : i64} {
  func.func @attention_kernel(%arg0: i32, %arg1: memref<1x8x16xbf16, #tpu.memory_space<vmem>>, %arg2: memref<1x8x16xbf16, #tpu.memory_space<vmem>>, %arg3: memref<1x8x32xbf16, #tpu.memory_space<vmem>>, %arg4: memref<16x48xbf16, #tpu.memory_space<vmem>>, %arg5: memref<1x48xf32, #tpu.memory_space<vmem>>, %arg6: memref<32x48xbf16, #tpu.memory_space<vmem>>, %arg7: memref<1x48xf32, #tpu.memory_space<vmem>>, %arg8: memref<16x96xbf16, #tpu.memory_space<vmem>>, %arg9: memref<1x32xf32, #tpu.memory_space<vmem>>, %arg10: memref<1x8x32xf32, #tpu.memory_space<vmem>>) attributes {dimension_semantics = [#tpu.dimension_semantics<parallel>], iteration_bounds = array<i64: 2>, scalar_prefetch = 0 : i64, scratch_operands = 0 : i64, tpu.core_type = #tpu.core_type<tc>, window_params = [{transform_indices = @transform_0, window_bounds = array<i64: 1, 8, 16>}, {transform_indices = @transform_1, window_bounds = array<i64: 1, 8, 16>}, {transform_indices = @transform_2, window_bounds = array<i64: 1, 8, 32>}, {pipeline_mode = #tpu.pipeline_mode<synchronous>, transform_indices = @transform_3, window_bounds = array<i64: 16, 48>}, {pipeline_mode = #tpu.pipeline_mode<synchronous>, transform_indices = @transform_4, window_bounds = array<i64: 1, 48>}, {pipeline_mode = #tpu.pipeline_mode<synchronous>, transform_indices = @transform_5, window_bounds = array<i64: 32, 48>}, {pipeline_mode = #tpu.pipeline_mode<synchronous>, transform_indices = @transform_6, window_bounds = array<i64: 1, 48>}, {pipeline_mode = #tpu.pipeline_mode<synchronous>, transform_indices = @transform_7, window_bounds = array<i64: 16, 96>}, {pipeline_mode = #tpu.pipeline_mode<synchronous>, transform_indices = @transform_8, window_bounds = array<i64: 1, 32>}, {transform_indices = @transform_9, window_bounds = array<i64: 1, 8, 32>}]} {
    %c0 = arith.constant 0 : index
    %c0_0 = arith.constant 0 : index
    %c0_1 = arith.constant 0 : index
    %0 = vector.load %arg1[%c0, %c0_0, %c0_1] : memref<1x8x16xbf16, #tpu.memory_space<vmem>>, vector<1x8x16xbf16>
    %1 = vector.shape_cast %0 : vector<1x8x16xbf16> to vector<8x16xbf16>
    %c0_2 = arith.constant 0 : index
    %c0_3 = arith.constant 0 : index
    %c0_4 = arith.constant 0 : index
    %2 = vector.load %arg2[%c0_2, %c0_3, %c0_4] : memref<1x8x16xbf16, #tpu.memory_space<vmem>>, vector<1x8x16xbf16>
    %3 = vector.shape_cast %2 : vector<1x8x16xbf16> to vector<8x16xbf16>
    %c0_5 = arith.constant 0 : index
    %c0_6 = arith.constant 0 : index
    %c0_7 = arith.constant 0 : index
    %4 = vector.load %arg3[%c0_5, %c0_6, %c0_7] : memref<1x8x32xbf16, #tpu.memory_space<vmem>>, vector<1x8x32xbf16>
    %5 = vector.shape_cast %4 : vector<1x8x32xbf16> to vector<8x32xbf16>
    %c0_8 = arith.constant 0 : index
    %c0_9 = arith.constant 0 : index
    %6 = vector.load %arg4[%c0_8, %c0_9] : memref<16x48xbf16, #tpu.memory_space<vmem>>, vector<16x48xbf16>
    %cst = arith.constant dense<0.000000e+00> : vector<8x48xf32>
    %7 = tpu.matmul %3, %6, %cst {dimension_numbers = #tpu.dot_dimension_numbers<[1], [0], [0], [1], [0, 0, 1, 1], [], []>} : vector<8x16xbf16>, vector<16x48xbf16>, vector<8x48xf32> -> vector<8x48xf32>
    %c0_10 = arith.constant 0 : index
    %c0_11 = arith.constant 0 : index
    %8 = vector.load %arg5[%c0_10, %c0_11] : memref<1x48xf32, #tpu.memory_space<vmem>>, vector<1x48xf32>
    %9 = vector.broadcast %8 : vector<1x48xf32> to vector<8x48xf32>
    %10 = arith.addf %7, %9 : vector<8x48xf32>
    %c0_12 = arith.constant 0 : index
    %c0_13 = arith.constant 0 : index
    %11 = vector.load %arg6[%c0_12, %c0_13] : memref<32x48xbf16, #tpu.memory_space<vmem>>, vector<32x48xbf16>
    %cst_14 = arith.constant dense<0.000000e+00> : vector<8x48xf32>
    %12 = tpu.matmul %5, %11, %cst_14 {dimension_numbers = #tpu.dot_dimension_numbers<[1], [0], [0], [1], [0, 0, 1, 1], [], []>} : vector<8x32xbf16>, vector<32x48xbf16>, vector<8x48xf32> -> vector<8x48xf32>
    %c0_15 = arith.constant 0 : index
    %c0_16 = arith.constant 0 : index
    %13 = vector.load %arg7[%c0_15, %c0_16] : memref<1x48xf32, #tpu.memory_space<vmem>>, vector<1x48xf32>
    %14 = vector.broadcast %13 : vector<1x48xf32> to vector<8x48xf32>
    %15 = arith.addf %12, %14 : vector<8x48xf32>
    %cst_17 = arith.constant 2.500000e-01 : f32
    %16 = vector.broadcast %cst_17 : f32 to vector<8x48xf32>
    %17 = arith.mulf %15, %16 : vector<8x48xf32>
    %c0_18 = arith.constant 0 : index
    %c0_19 = arith.constant 0 : index
    %18 = vector.load %arg8[%c0_18, %c0_19] : memref<16x96xbf16, #tpu.memory_space<vmem>>, vector<16x96xbf16>
    %cst_20 = arith.constant dense<0.000000e+00> : vector<8x96xf32>
    %19 = tpu.matmul %1, %18, %cst_20 {dimension_numbers = #tpu.dot_dimension_numbers<[1], [0], [0], [1], [0, 0, 1, 1], [], []>} : vector<8x16xbf16>, vector<16x96xbf16>, vector<8x96xf32> -> vector<8x96xf32>
    %20 = arith.truncf %10 : vector<8x48xf32> to vector<8x48xbf16>
    %21 = arith.truncf %17 : vector<8x48xf32> to vector<8x48xbf16>
    %22 = arith.truncf %19 : vector<8x96xf32> to vector<8x96xbf16>
    %23 = vector.extract_strided_slice %21 {offsets = [0, 0], sizes = [8, 16], strides = [1, 1]} : vector<8x48xbf16> to vector<8x16xbf16>
    %24 = vector.extract_strided_slice %20 {offsets = [0, 0], sizes = [8, 16], strides = [1, 1]} : vector<8x48xbf16> to vector<8x16xbf16>
    %cst_21 = arith.constant dense<0.000000e+00> : vector<8x8xf32>
    %25 = tpu.matmul %23, %24, %cst_21 {dimension_numbers = #tpu.dot_dimension_numbers<[1], [1], [0], [0], [0, 0, 1, 0], [], []>} : vector<8x16xbf16>, vector<8x16xbf16>, vector<8x8xf32> -> vector<8x8xf32>
    %26 = vector.extract_strided_slice %21 {offsets = [0, 16], sizes = [8, 16], strides = [1, 1]} : vector<8x48xbf16> to vector<8x16xbf16>
    %27 = vector.extract_strided_slice %20 {offsets = [0, 16], sizes = [8, 16], strides = [1, 1]} : vector<8x48xbf16> to vector<8x16xbf16>
    %cst_22 = arith.constant dense<0.000000e+00> : vector<8x8xf32>
    %28 = tpu.matmul %26, %27, %cst_22 {dimension_numbers = #tpu.dot_dimension_numbers<[1], [1], [0], [0], [0, 0, 1, 0], [], []>} : vector<8x16xbf16>, vector<8x16xbf16>, vector<8x8xf32> -> vector<8x8xf32>
    %29 = vector.extract_strided_slice %21 {offsets = [0, 32], sizes = [8, 16], strides = [1, 1]} : vector<8x48xbf16> to vector<8x16xbf16>
    %30 = vector.extract_strided_slice %20 {offsets = [0, 32], sizes = [8, 16], strides = [1, 1]} : vector<8x48xbf16> to vector<8x16xbf16>
    %cst_23 = arith.constant dense<0.000000e+00> : vector<8x8xf32>
    %31 = tpu.matmul %29, %30, %cst_23 {dimension_numbers = #tpu.dot_dimension_numbers<[1], [1], [0], [0], [0, 0, 1, 0], [], []>} : vector<8x16xbf16>, vector<8x16xbf16>, vector<8x8xf32> -> vector<8x8xf32>
    %32 = arith.maximumf %25, %28 : vector<8x8xf32>
    %33 = arith.maximumf %32, %31 : vector<8x8xf32>
    %34 = arith.subf %25, %33 : vector<8x8xf32>
    %35 = math.exp %34 : vector<8x8xf32>
    %36 = arith.subf %28, %33 : vector<8x8xf32>
    %37 = math.exp %36 : vector<8x8xf32>
    %38 = arith.addf %35, %37 : vector<8x8xf32>
    %39 = arith.subf %31, %33 : vector<8x8xf32>
    %40 = math.exp %39 : vector<8x8xf32>
    %41 = arith.addf %38, %40 : vector<8x8xf32>
    %42 = tpu.reciprocal %41 {approx = true} : vector<8x8xf32> -> vector<8x8xf32>
    %43 = arith.mulf %35, %42 : vector<8x8xf32>
    %44 = arith.truncf %43 : vector<8x8xf32> to vector<8x8xbf16>
    %45 = vector.extract_strided_slice %22 {offsets = [0, 0], sizes = [8, 32], strides = [1, 1]} : vector<8x96xbf16> to vector<8x32xbf16>
    %cst_24 = arith.constant dense<0.000000e+00> : vector<8x32xf32>
    %46 = tpu.matmul %44, %45, %cst_24 {dimension_numbers = #tpu.dot_dimension_numbers<[1], [0], [0], [1], [0, 0, 1, 1], [], []>} : vector<8x8xbf16>, vector<8x32xbf16>, vector<8x32xf32> -> vector<8x32xf32>
    %47 = arith.mulf %37, %42 : vector<8x8xf32>
    %48 = arith.truncf %47 : vector<8x8xf32> to vector<8x8xbf16>
    %49 = vector.extract_strided_slice %22 {offsets = [0, 32], sizes = [8, 32], strides = [1, 1]} : vector<8x96xbf16> to vector<8x32xbf16>
    %cst_25 = arith.constant dense<0.000000e+00> : vector<8x32xf32>
    %50 = tpu.matmul %48, %49, %cst_25 {dimension_numbers = #tpu.dot_dimension_numbers<[1], [0], [0], [1], [0, 0, 1, 1], [], []>} : vector<8x8xbf16>, vector<8x32xbf16>, vector<8x32xf32> -> vector<8x32xf32>
    %51 = arith.addf %46, %50 : vector<8x32xf32>
    %52 = arith.mulf %40, %42 : vector<8x8xf32>
    %53 = arith.truncf %52 : vector<8x8xf32> to vector<8x8xbf16>
    %54 = vector.extract_strided_slice %22 {offsets = [0, 64], sizes = [8, 32], strides = [1, 1]} : vector<8x96xbf16> to vector<8x32xbf16>
    %cst_26 = arith.constant dense<0.000000e+00> : vector<8x32xf32>
    %55 = tpu.matmul %53, %54, %cst_26 {dimension_numbers = #tpu.dot_dimension_numbers<[1], [0], [0], [1], [0, 0, 1, 1], [], []>} : vector<8x8xbf16>, vector<8x32xbf16>, vector<8x32xf32> -> vector<8x32xf32>
    %56 = arith.addf %51, %55 : vector<8x32xf32>
    %c0_27 = arith.constant 0 : index
    %c0_28 = arith.constant 0 : index
    %57 = vector.load %arg9[%c0_27, %c0_28] : memref<1x32xf32, #tpu.memory_space<vmem>>, vector<1x32xf32>
    %58 = vector.broadcast %57 : vector<1x32xf32> to vector<8x32xf32>
    %59 = arith.addf %56, %58 : vector<8x32xf32>
    %cst_29 = arith.constant 0.000000e+00 : f32
    %60 = vector.broadcast %cst_29 : f32 to vector<8x32xf32>
    %61 = arith.maximumf %59, %60 : vector<8x32xf32>
    %c0_30 = arith.constant 0 : index
    %c0_31 = arith.constant 0 : index
    %c0_32 = arith.constant 0 : index
    %62 = vector.load %arg10[%c0_30, %c0_31, %c0_32] : memref<1x8x32xf32, #tpu.memory_space<vmem>>, vector<1x8x32xf32>
    %63 = vector.shape_cast %62 : vector<1x8x32xf32> to vector<8x32xf32>
    %64 = vector.shape_cast %61 : vector<8x32xf32> to vector<1x8x32xf32>
    tpu.vector_store %arg10[%c0_30, %c0_31, %c0_32], %64 {strides = array<i32>} : memref<1x8x32xf32, #tpu.memory_space<vmem>>, vector<1x8x32xf32>,
    return
  }
  func.func @transform_0(%arg0: i32) -> (i32, i32, i32) {
    %c0_i32 = arith.constant 0 : i32
    %c0_i32_0 = arith.constant 0 : i32
    %c0_i32_1 = arith.constant 0 : i32
    return %arg0, %c0_i32, %c0_i32_0 : i32, i32, i32
  }
  func.func @transform_1(%arg0: i32) -> (i32, i32, i32) {
    %c0_i32 = arith.constant 0 : i32
    %c0_i32_0 = arith.constant 0 : i32
    %c0_i32_1 = arith.constant 0 : i32
    return %arg0, %c0_i32, %c0_i32_0 : i32, i32, i32
  }
  func.func @transform_2(%arg0: i32) -> (i32, i32, i32) {
    %c0_i32 = arith.constant 0 : i32
    %c0_i32_0 = arith.constant 0 : i32
    %c0_i32_1 = arith.constant 0 : i32
    return %arg0, %c0_i32, %c0_i32_0 : i32, i32, i32
  }
  func.func @transform_3(%arg0: i32) -> (i32, i32) {
    %c0_i32 = arith.constant 0 : i32
    %c0_i32_0 = arith.constant 0 : i32
    %c0_i32_1 = arith.constant 0 : i32
    return %c0_i32, %c0_i32_0 : i32, i32
  }
  func.func @transform_4(%arg0: i32) -> (i32, i32) {
    %c0_i32 = arith.constant 0 : i32
    %c0_i32_0 = arith.constant 0 : i32
    %c0_i32_1 = arith.constant 0 : i32
    return %c0_i32, %c0_i32_0 : i32, i32
  }
  func.func @transform_5(%arg0: i32) -> (i32, i32) {
    %c0_i32 = arith.constant 0 : i32
    %c0_i32_0 = arith.constant 0 : i32
    %c0_i32_1 = arith.constant 0 : i32
    return %c0_i32, %c0_i32_0 : i32, i32
  }
  func.func @transform_6(%arg0: i32) -> (i32, i32) {
    %c0_i32 = arith.constant 0 : i32
    %c0_i32_0 = arith.constant 0 : i32
    %c0_i32_1 = arith.constant 0 : i32
    return %c0_i32, %c0_i32_0 : i32, i32
  }
  func.func @transform_7(%arg0: i32) -> (i32, i32) {
    %c0_i32 = arith.constant 0 : i32
    %c0_i32_0 = arith.constant 0 : i32
    %c0_i32_1 = arith.constant 0 : i32
    return %c0_i32, %c0_i32_0 : i32, i32
  }
  func.func @transform_8(%arg0: i32) -> (i32, i32) {
    %c0_i32 = arith.constant 0 : i32
    %c0_i32_0 = arith.constant 0 : i32
    %c0_i32_1 = arith.constant 0 : i32
    return %c0_i32, %c0_i32_0 : i32, i32
  }
  func.func @transform_9(%arg0: i32) -> (i32, i32, i32) {
    %c0_i32 = arith.constant 0 : i32
    %c0_i32_0 = arith.constant 0 : i32
    %c0_i32_1 = arith.constant 0 : i32
    return %arg0, %c0_i32, %c0_i32_0 : i32, i32, i32
  }
}

</mosaic_0001>

<llo_original>
// kernel: tpu_custom_call.1
$region0: #{tpu_custom_call.1}
  #allocation0 [shape = 'u32[]', space=smem, size = 0x4, offset = 0x4, fixed_abs, tag = 'smem constant byte address 0x4 - core index']
  #allocation1 [shape = 'u32[144,128]{1,0:T(1,128)}', space=vmem, size = 0x12000, scoped, tag = 'internal scratch']
  %s0 = inlined_call_operand.hbm [shape: bf16[2,8,16], index: 0, kind: input, shape index: {}]
  %s1 = inlined_call_operand.hbm [shape: bf16[2,8,16], index: 1, kind: input, shape index: {}]
  %s2 = inlined_call_operand.hbm [shape: bf16[2,8,32], index: 2, kind: input, shape index: {}]
  %s3 = inlined_call_operand.hbm [shape: bf16[16,48], index: 3, kind: input, shape index: {}]
  %s4 = inlined_call_operand.vmem [shape: f32[1,48], index: 4, kind: input, shape index: {}]
  %s5 = inlined_call_operand.vmem [shape: bf16[32,48], index: 5, kind: input, shape index: {}]
  %s6 = inlined_call_operand.vmem [shape: f32[1,48], index: 6, kind: input, shape index: {}]
  %s7 = inlined_call_operand.vmem [shape: bf16[16,96], index: 7, kind: input, shape index: {}]
  %s8 = inlined_call_operand.vmem [shape: f32[1,32], index: 8, kind: input, shape index: {}]
  %s9 = inlined_call_operand.hbm [shape: f32[2,8,32], index: 9, kind: output, shape index: {}]
  %s10 = sld [smem:[#allocation0]]
  $region85: #{tpu_custom_call.1} parent=0
    _
  %s12 = ssub.s32 1, %s10
  %s13 = scalar_select 0, %s12, %s10
  $region1: #{tpu_custom_call.1} parent=0
    #allocation2 [shape = 'u8[4096]{0}', space=vmem, size = 0x1000, scoped, tag = 'input window, operand 0']
    #allocation3 [shape = 's32[2]{0}', space=sflag, size = 0x8, scoped, tag = 'scoped memory for tpu_custom_call.1']
    #allocation4 [shape = 's32[2]{0}', space=sflag, size = 0x8, scoped, tag = 'scoped memory for tpu_custom_call.1']
    #allocation5 [shape = 'u8[4096]{0}', space=vmem, size = 0x1000, scoped, tag = 'input window, operand 1']
    #allocation6 [shape = 's32[2]{0}', space=sflag, size = 0x8, scoped, tag = 'scoped memory for tpu_custom_call.1']
    #allocation7 [shape = 'u8[4096]{0}', space=vmem, size = 0x1000, scoped, tag = 'input window, operand 2']
    #allocation8 [shape = 'u8[4096]{0}', space=vmem, size = 0x1000, scoped, tag = 'input window, operand 3, single buffered']
    #allocation9 [shape = 's32[1]{0}', space=sflag, size = 0x4, scoped, tag = 'scoped memory for tpu_custom_call.1']
    #allocation10 [shape = 'u8[8192]{0}', space=vmem, size = 0x2000, scoped, tag = 'output window, operand 0']
    %14 = vsyncpa [#allocation3], 0
    %s15 = scalar_lea.sflag [#allocation3], 1
    %16 = vsyncpa %s15, 0
    %17 = vsyncpa [#allocation6], 0
    %s18 = scalar_lea.sflag [#allocation6], 1
    %19 = vsyncpa %s18, 0
    %20 = vsyncpa [#allocation9], 0
    %21 = vsyncpa [#allocation4], 0
    %s22 = scalar_lea.sflag [#allocation4], 1
    %23 = vsyncpa %s22, 0
    loop: start=0, step=1, limit=4
    $region2: #{tpu_custom_call.1} parent=1 // loop_pre_header
      _
    $region3: #{tpu_custom_call.1} parent=1 // loop_header
      %s25 = sphi 0, %s29
      %p26 = scmp.ge.s32.totalorder %s25, 4
      %s35 = sphi 0, %s37
      %s38 = sphi 0, %s35
      %s39 = sphi 0, %s38
      %s55 = sphi 0, %s39
      %s61 = sphi 0, %s63
      %s64 = sphi 0, %s61
      %s65 = sphi 0, %s64
      %s81 = sphi 0, %s65
      %s87 = sphi 0, %s89
      %s90 = sphi 0, %s87
      %s91 = sphi 0, %s90
      %s107 = sphi 0, %s91
      %s111 = sphi 0, %s111
      %s113 = sphi 0, %s111
      %s114 = sphi 0, %s113
      %s128 = sphi 0, %s114
      %s132 = sphi 0, %s132
      %s134 = sphi 0, %s132
      %s135 = sphi 0, %s134
      %s149 = sphi 0, %s135
      %s153 = sphi 0, %s153
      %s155 = sphi 0, %s153
      %s156 = sphi 0, %s155
      %s170 = sphi 0, %s156
      %s174 = sphi 0, %s174
      %s176 = sphi 0, %s174
      %s177 = sphi 0, %s176
      %s191 = sphi 0, %s177
      %s195 = sphi 0, %s195
      %s197 = sphi 0, %s195
      %s198 = sphi 0, %s197
      %s212 = sphi 0, %s198
      %s216 = sphi 0, %s216
      %s218 = sphi 0, %s216
      %s219 = sphi 0, %s218
      %s233 = sphi 0, %s219
      %s239 = sphi 0, %s241
      %s242 = sphi 0, %s239
      %s243 = sphi 0, %s242
      %s259 = sphi 0, %s243
    $region4: #{tpu_custom_call.1} parent=1 // loop_header_branch
      %28 = sbr.rel (%p26) target = $region8
    $region5: #{tpu_custom_call.1} parent=1 // loop_body
      %s30 = ssub.s32 %s25, 1
      %s31 = ssub.s32 %s25, 2
      %s32 = sadd.s32 %s25, 1
      %s33 = ssub.s32 %s25, %s32
      %p34 = scmp.eq.s32.totalorder %s33, 0
      %s36 = sadd.s32 %s35, 1
      %s37 = scalar_select %p34, %s35, %s36
      %p40 = pneg %p34
      %p41 = scmp.eq.s32.totalorder %s25, 1
      %p42 = por %p40, %p41
      %p43 = scmp.ne.s32.totalorder %s35, %s38
      %p44 = scmp.eq.s32.totalorder %s25, 0
      %p45 = por %p43, %p44
      %p46 = scmp.ne.s32.totalorder %s35, %s38
      %p47 = scmp.eq.s32.totalorder %s30, 1
      %p48 = por %p46, %p47
      %p49 = scmp.ne.s32.totalorder %s38, %s39
      %p50 = scmp.eq.s32.totalorder %s30, 0
      %p51 = por %p49, %p50
      %p52 = scmp.ne.s32.totalorder %s38, %s39
      %p53 = scmp.eq.s32.totalorder %s31, 1
      %p54 = por %p52, %p53
      %p56 = scmp.ne.s32.totalorder %s39, %s55
      %p57 = scmp.eq.s32.totalorder %s31, 0
      %p58 = por %p56, %p57
      %s59 = ssub.s32 %s25, %s32
      %p60 = scmp.eq.s32.totalorder %s59, 0
      %s62 = sadd.s32 %s61, 1
      %s63 = scalar_select %p60, %s61, %s62
      %p66 = pneg %p60
      %p67 = scmp.eq.s32.totalorder %s25, 1
      %p68 = por %p66, %p67
      %p69 = scmp.ne.s32.totalorder %s61, %s64
      %p70 = scmp.eq.s32.totalorder %s25, 0
      %p71 = por %p69, %p70
      %p72 = scmp.ne.s32.totalorder %s61, %s64
      %p73 = scmp.eq.s32.totalorder %s30, 1
      %p74 = por %p72, %p73
      %p75 = scmp.ne.s32.totalorder %s64, %s65
      %p76 = scmp.eq.s32.totalorder %s30, 0
      %p77 = por %p75, %p76
      %p78 = scmp.ne.s32.totalorder %s64, %s65
      %p79 = scmp.eq.s32.totalorder %s31, 1
      %p80 = por %p78, %p79
      %p82 = scmp.ne.s32.totalorder %s65, %s81
      %p83 = scmp.eq.s32.totalorder %s31, 0
      %p84 = por %p82, %p83
      %s85 = ssub.s32 %s25, %s32
      %p86 = scmp.eq.s32.totalorder %s85, 0
      %s88 = sadd.s32 %s87, 1
      %s89 = scalar_select %p86, %s87, %s88
      %p92 = pneg %p86
      %p93 = scmp.eq.s32.totalorder %s25, 1
      %p94 = por %p92, %p93
      %p95 = scmp.ne.s32.totalorder %s87, %s90
      %p96 = scmp.eq.s32.totalorder %s25, 0
      %p97 = por %p95, %p96
      %p98 = scmp.ne.s32.totalorder %s87, %s90
      %p99 = scmp.eq.s32.totalorder %s30, 1
      %p100 = por %p98, %p99
      %p101 = scmp.ne.s32.totalorder %s90, %s91
      %p102 = scmp.eq.s32.totalorder %s30, 0
      %p103 = por %p101, %p102
      %p104 = scmp.ne.s32.totalorder %s90, %s91
      %p105 = scmp.eq.s32.totalorder %s31, 1
      %p106 = por %p104, %p105
      %p108 = scmp.ne.s32.totalorder %s91, %s107
      %p109 = scmp.eq.s32.totalorder %s31, 0
      %p110 = por %p108, %p109
      %s112 = sadd.s32 %s111, 1
      %p115 = scmp.eq.s32.totalorder %s25, 1
      %p116 = scmp.ne.s32.totalorder %s111, %s113
      %p117 = scmp.eq.s32.totalorder %s25, 0
      %p118 = por %p116, %p117
      %p119 = scmp.ne.s32.totalorder %s111, %s113
      %p120 = scmp.eq.s32.totalorder %s30, 1
      %p121 = por %p119, %p120
      %p122 = scmp.ne.s32.totalorder %s113, %s114
      %p123 = scmp.eq.s32.totalorder %s30, 0
      %p124 = por %p122, %p123
      %p125 = scmp.ne.s32.totalorder %s113, %s114
      %p126 = scmp.eq.s32.totalorder %s31, 1
      %p127 = por %p125, %p126
      %p129 = scmp.ne.s32.totalorder %s114, %s128
      %p130 = scmp.eq.s32.totalorder %s31, 0
      %p131 = por %p129, %p130
      %s133 = sadd.s32 %s132, 1
      %p136 = scmp.eq.s32.totalorder %s25, 1
      %p137 = scmp.ne.s32.totalorder %s132, %s134
      %p138 = scmp.eq.s32.totalorder %s25, 0
      %p139 = por %p137, %p138
      %p140 = scmp.ne.s32.totalorder %s132, %s134
      %p141 = scmp.eq.s32.totalorder %s30, 1
      %p142 = por %p140, %p141
      %p143 = scmp.ne.s32.totalorder %s134, %s135
      %p144 = scmp.eq.s32.totalorder %s30, 0
      %p145 = por %p143, %p144
      %p146 = scmp.ne.s32.totalorder %s134, %s135
      %p147 = scmp.eq.s32.totalorder %s31, 1
      %p148 = por %p146, %p147
      %p150 = scmp.ne.s32.totalorder %s135, %s149
      %p151 = scmp.eq.s32.totalorder %s31, 0
      %p152 = por %p150, %p151
      %s154 = sadd.s32 %s153, 1
      %p157 = scmp.eq.s32.totalorder %s25, 1
      %p158 = scmp.ne.s32.totalorder %s153, %s155
      %p159 = scmp.eq.s32.totalorder %s25, 0
      %p160 = por %p158, %p159
      %p161 = scmp.ne.s32.totalorder %s153, %s155
      %p162 = scmp.eq.s32.totalorder %s30, 1
      %p163 = por %p161, %p162
      %p164 = scmp.ne.s32.totalorder %s155, %s156
      %p165 = scmp.eq.s32.totalorder %s30, 0
      %p166 = por %p164, %p165
      %p167 = scmp.ne.s32.totalorder %s155, %s156
      %p168 = scmp.eq.s32.totalorder %s31, 1
      %p169 = por %p167, %p168
      %p171 = scmp.ne.s32.totalorder %s156, %s170
      %p172 = scmp.eq.s32.totalorder %s31, 0
      %p173 = por %p171, %p172
      %s175 = sadd.s32 %s174, 1
      %p178 = scmp.eq.s32.totalorder %s25, 1
      %p179 = scmp.ne.s32.totalorder %s174, %s176
      %p180 = scmp.eq.s32.totalorder %s25, 0
      %p181 = por %p179, %p180
      %p182 = scmp.ne.s32.totalorder %s174, %s176
      %p183 = scmp.eq.s32.totalorder %s30, 1
      %p184 = por %p182, %p183
      %p185 = scmp.ne.s32.totalorder %s176, %s177
      %p186 = scmp.eq.s32.totalorder %s30, 0
      %p187 = por %p185, %p186
      %p188 = scmp.ne.s32.totalorder %s176, %s177
      %p189 = scmp.eq.s32.totalorder %s31, 1
      %p190 = por %p188, %p189
      %p192 = scmp.ne.s32.totalorder %s177, %s191
      %p193 = scmp.eq.s32.totalorder %s31, 0
      %p194 = por %p192, %p193
      %s196 = sadd.s32 %s195, 1
      %p199 = scmp.eq.s32.totalorder %s25, 1
      %p200 = scmp.ne.s32.totalorder %s195, %s197
      %p201 = scmp.eq.s32.totalorder %s25, 0
      %p202 = por %p200, %p201
      %p203 = scmp.ne.s32.totalorder %s195, %s197
      %p204 = scmp.eq.s32.totalorder %s30, 1
      %p205 = por %p203, %p204
      %p206 = scmp.ne.s32.totalorder %s197, %s198
      %p207 = scmp.eq.s32.totalorder %s30, 0
      %p208 = por %p206, %p207
      %p209 = scmp.ne.s32.totalorder %s197, %s198
      %p210 = scmp.eq.s32.totalorder %s31, 1
      %p211 = por %p209, %p210
      %p213 = scmp.ne.s32.totalorder %s198, %s212
      %p214 = scmp.eq.s32.totalorder %s31, 0
      %p215 = por %p213, %p214
      %s217 = sadd.s32 %s216, 1
      %p220 = scmp.eq.s32.totalorder %s25, 1
      %p221 = scmp.ne.s32.totalorder %s216, %s218
      %p222 = scmp.eq.s32.totalorder %s25, 0
      %p223 = por %p221, %p222
      %p224 = scmp.ne.s32.totalorder %s216, %s218
      %p225 = scmp.eq.s32.totalorder %s30, 1
      %p226 = por %p224, %p225
      %p227 = scmp.ne.s32.totalorder %s218, %s219
      %p228 = scmp.eq.s32.totalorder %s30, 0
      %p229 = por %p227, %p228
      %p230 = scmp.ne.s32.totalorder %s218, %s219
      %p231 = scmp.eq.s32.totalorder %s31, 1
      %p232 = por %p230, %p231
      %p234 = scmp.ne.s32.totalorder %s219, %s233
      %p235 = scmp.eq.s32.totalorder %s31, 0
      %p236 = por %p234, %p235
      %s237 = ssub.s32 %s25, %s32
      %p238 = scmp.eq.s32.totalorder %s237, 0
      %s240 = sadd.s32 %s239, 1
      %s241 = scalar_select %p238, %s239, %s240
      %p244 = pneg %p238
      %p245 = scmp.eq.s32.totalorder %s25, 1
      %p246 = por %p244, %p245
      %p247 = scmp.ne.s32.totalorder %s239, %s242
      %p248 = scmp.eq.s32.totalorder %s25, 0
      %p249 = por %p247, %p248
      %p250 = scmp.ne.s32.totalorder %s239, %s242
      %p251 = scmp.eq.s32.totalorder %s30, 1
      %p252 = por %p250, %p251
      %p253 = scmp.ne.s32.totalorder %s242, %s243
      %p254 = scmp.eq.s32.totalorder %s30, 0
      %p255 = por %p253, %p254
      %p256 = scmp.ne.s32.totalorder %s242, %s243
      %p257 = scmp.eq.s32.totalorder %s31, 1
      %p258 = por %p256, %p257
      %p260 = scmp.ne.s32.totalorder %s243, %s259
      %p261 = scmp.eq.s32.totalorder %s31, 0
      %p262 = por %p260, %p261
      %p263 = scmp.le.s32.totalorder 1, %s25
      %p264 = scmp.lt.s32.totalorder %s25, 3
      %p265 = pnand %p263, %p264
      %p266 = pneg %p265
      // Predicated region
      $region9: #{tpu_custom_call.1} parent=5 // pred_check
        _
      $region10: #{tpu_custom_call.1} parent=5 // pred_check_branch
        %268 = sbr.rel (%p265) target = $region12
      $region11: #{tpu_custom_call.1} parent=5 // pred_region
        %s269 = ssub.s32 %s25, 1
        // Predicated region
        $region13: #{tpu_custom_call.1} parent=11 // pred_check
          %p270 = pneg %p124
        $region14: #{tpu_custom_call.1} parent=11 // pred_check_branch
          %272 = sbr.rel (%p270) target = $region16
        $region15: #{tpu_custom_call.1} parent=11 // pred_region
          %s274 = ssub.s32 128, 128
          %275 = vsyncadd [#allocation9], %s274
          %s276 = sshll.u32 [#allocation8], 4
          %s277 = int_to_ptr.vmem [resolvable:$true] %s276
          %282 = dma.hbm_to_vmem [thread:$0]  %s3, 128, %s277, [#allocation9], 64, 64, 4
        $region16: #{tpu_custom_call.1} parent=11 // pred_fallthru
          _
        // Predicated region
        $region17: #{tpu_custom_call.1} parent=11 // pred_check
          %p283 = pneg %p145
        $region18: #{tpu_custom_call.1} parent=11 // pred_check_branch
          %285 = sbr.rel (%p283) target = $region20
        $region19: #{tpu_custom_call.1} parent=11 // pred_region
          _
        $region20: #{tpu_custom_call.1} parent=11 // pred_fallthru
          _
        // Predicated region
        $region21: #{tpu_custom_call.1} parent=11 // pred_check
          %p286 = pneg %p166
        $region22: #{tpu_custom_call.1} parent=11 // pred_check_branch
          %288 = sbr.rel (%p286) target = $region24
        $region23: #{tpu_custom_call.1} parent=11 // pred_region
          _
        $region24: #{tpu_custom_call.1} parent=11 // pred_fallthru
          _
        // Predicated region
        $region25: #{tpu_custom_call.1} parent=11 // pred_check
          %p289 = pneg %p187
        $region26: #{tpu_custom_call.1} parent=11 // pred_check_branch
          %291 = sbr.rel (%p289) target = $region28
        $region27: #{tpu_custom_call.1} parent=11 // pred_region
          _
        $region28: #{tpu_custom_call.1} parent=11 // pred_fallthru
          _
        // Predicated region
        $region29: #{tpu_custom_call.1} parent=11 // pred_check
          %p292 = pneg %p208
        $region30: #{tpu_custom_call.1} parent=11 // pred_check_branch
          %294 = sbr.rel (%p292) target = $region32
        $region31: #{tpu_custom_call.1} parent=11 // pred_region
          _
        $region32: #{tpu_custom_call.1} parent=11 // pred_fallthru
          _
        // Predicated region
        $region33: #{tpu_custom_call.1} parent=11 // pred_check
          %p295 = pneg %p229
        $region34: #{tpu_custom_call.1} parent=11 // pred_check_branch
          %297 = sbr.rel (%p295) target = $region36
        $region35: #{tpu_custom_call.1} parent=11 // pred_region
          _
        $region36: #{tpu_custom_call.1} parent=11 // pred_fallthru
          _
      $region12: #{tpu_custom_call.1} parent=5 // pred_fallthru
        _
      %p298 = scmp.lt.s32.totalorder %s25, 2
      // Predicated region
      $region37: #{tpu_custom_call.1} parent=5 // pred_check
        %p299 = pneg %p298
      $region38: #{tpu_custom_call.1} parent=5 // pred_check_branch
        %301 = sbr.rel (%p299) target = $region40
      $region39: #{tpu_custom_call.1} parent=5 // pred_region
        // Predicated region
        $region41: #{tpu_custom_call.1} parent=39 // pred_check
          %p302 = pneg %p45
        $region42: #{tpu_custom_call.1} parent=39 // pred_check_branch
          %304 = sbr.rel (%p302) target = $region44
        $region43: #{tpu_custom_call.1} parent=39 // pred_region
          %s305 = sand.u32 %s35, 1
          %s306 = scalar_lea.sflag [#allocation3], %s305
          %s307 = sand.u32 %s35, 1
          %s308 = smul.addr %s307, 4
          %s309 = scalar_lea.vmem [#allocation2], %s308
          %s311 = ssub.s32 64, 64
          %312 = vsyncadd %s306, %s311
          %s313 = smul.addr %s25, 64
          %s314 = scalar_lea.hbm %s0, %s313
          %s316 = sshll.u32 %s309, 4
          %s317 = int_to_ptr.vmem [resolvable:$true] %s316
          %319 = dma.hbm_to_vmem [thread:$0]  %s314, 64, %s317, %s306
        $region44: #{tpu_custom_call.1} parent=39 // pred_fallthru
          _
        // Predicated region
        $region45: #{tpu_custom_call.1} parent=39 // pred_check
          %p320 = pneg %p71
        $region46: #{tpu_custom_call.1} parent=39 // pred_check_branch
          %322 = sbr.rel (%p320) target = $region48
        $region47: #{tpu_custom_call.1} parent=39 // pred_region
          %s323 = sand.u32 %s25, 1
          %s324 = scalar_lea.sflag [#allocation6], %s323
          %s325 = sand.u32 %s61, 1
          %s326 = smul.addr %s325, 4
          %s327 = scalar_lea.vmem [#allocation5], %s326
          %s329 = ssub.s32 64, 64
          %330 = vsyncadd %s324, %s329
          %s331 = smul.addr %s25, 64
          %s332 = scalar_lea.hbm %s1, %s331
          %s334 = sshll.u32 %s327, 4
          %s335 = int_to_ptr.vmem [resolvable:$true] %s334
          %337 = dma.hbm_to_vmem [thread:$0]  %s332, 64, %s335, %s324
        $region48: #{tpu_custom_call.1} parent=39 // pred_fallthru
          _
        // Predicated region
        $region49: #{tpu_custom_call.1} parent=39 // pred_check
          %p338 = pneg %p97
        $region50: #{tpu_custom_call.1} parent=39 // pred_check_branch
          %340 = sbr.rel (%p338) target = $region52
        $region51: #{tpu_custom_call.1} parent=39 // pred_region
          %s341 = sand.u32 %s25, 1
          %s342 = scalar_lea.sflag [#allocation6], %s341
          %s343 = sand.u32 %s87, 1
          %s344 = smul.addr %s343, 4
          %s345 = scalar_lea.vmem [#allocation7], %s344
          %s347 = ssub.s32 64, 64
          %348 = vsyncadd %s342, %s347
          %s349 = smul.addr %s25, 64
          %s350 = scalar_lea.hbm %s2, %s349
          %s352 = sshll.u32 %s345, 4
          %s353 = int_to_ptr.vmem [resolvable:$true] %s352
          %355 = dma.hbm_to_vmem [thread:$0]  %s350, 64, %s353, %s342
        $region52: #{tpu_custom_call.1} parent=39 // pred_fallthru
          _
      $region40: #{tpu_custom_call.1} parent=5 // pred_fallthru
        _
      %p356 = scmp.le.s32.totalorder 1, %s25
      %p357 = scmp.lt.s32.totalorder %s25, 3
      %p358 = pnand %p356, %p357
      %p359 = pneg %p358
      // Predicated region
      $region53: #{tpu_custom_call.1} parent=5 // pred_check
        _
      $region54: #{tpu_custom_call.1} parent=5 // pred_check_branch
        %361 = sbr.rel (%p358) target = $region56
      $region55: #{tpu_custom_call.1} parent=5 // pred_region
        %s362 = ssub.s32 %s25, 1
        %s363 = sand.u32 %s38, 1
        %s364 = scalar_lea.sflag [#allocation3], %s363
        %s365 = sand.u32 %s38, 1
        %s366 = smul.addr %s365, 4
        %s367 = scalar_lea.vmem [#allocation2], %s366
        // Predicated region
        $region57: #{tpu_custom_call.1} parent=55 // pred_check
          %p368 = pneg %p51
        $region58: #{tpu_custom_call.1} parent=55 // pred_check_branch
          %370 = sbr.rel (%p368) target = $region60
        $region59: #{tpu_custom_call.1} parent=55 // pred_region
          %371 = dma.done %s364, 64
        $region60: #{tpu_custom_call.1} parent=55 // pred_fallthru
          _
        %s372 = sand.u32 %s30, 1
        %s373 = scalar_lea.sflag [#allocation6], %s372
        %s374 = sand.u32 %s64, 1
        %s375 = smul.addr %s374, 4
        %s376 = scalar_lea.vmem [#allocation5], %s375
        // Predicated region
        $region61: #{tpu_custom_call.1} parent=55 // pred_check
          %p377 = pneg %p77
        $region62: #{tpu_custom_call.1} parent=55 // pred_check_branch
          %379 = sbr.rel (%p377) target = $region64
        $region63: #{tpu_custom_call.1} parent=55 // pred_region
          %380 = dma.done %s373, 64
        $region64: #{tpu_custom_call.1} parent=55 // pred_fallthru
          _
        %s381 = sand.u32 %s30, 1
        %s382 = scalar_lea.sflag [#allocation6], %s381
        %s383 = sand.u32 %s90, 1
        %s384 = smul.addr %s383, 4
        %s385 = scalar_lea.vmem [#allocation7], %s384
        // Predicated region
        $region65: #{tpu_custom_call.1} parent=55 // pred_check
          %p386 = pneg %p103
        $region66: #{tpu_custom_call.1} parent=55 // pred_check_branch
          %388 = sbr.rel (%p386) target = $region68
        $region67: #{tpu_custom_call.1} parent=55 // pred_region
          %389 = dma.done %s382, 64
        $region68: #{tpu_custom_call.1} parent=55 // pred_fallthru
          _
        // Predicated region
        $region69: #{tpu_custom_call.1} parent=55 // pred_check
          %p390 = pneg %p124
        $region70: #{tpu_custom_call.1} parent=55 // pred_check_branch
          %392 = sbr.rel (%p390) target = $region72
        $region71: #{tpu_custom_call.1} parent=55 // pred_region
          %393 = dma.done [#allocation9], 128
        $region72: #{tpu_custom_call.1} parent=55 // pred_fallthru
          _
        %s394 = sand.u32 %s38, 1
        %s395 = scalar_lea.sflag [#allocation3], %s394
        %s396 = sand.u32 %s38, 1
        %s397 = smul.addr %s396, 4
        %s398 = scalar_lea.vmem [#allocation2], %s397
        %p399 = pneg %p51
        %p400 = pneg %p48
        %s401 = sand.u32 %s30, 1
        %s402 = scalar_lea.sflag [#allocation6], %s401
        %s403 = sand.u32 %s64, 1
        %s404 = smul.addr %s403, 4
        %s405 = scalar_lea.vmem [#allocation5], %s404
        %p406 = pneg %p77
        %p407 = pneg %p74
        %s408 = sand.u32 %s30, 1
        %s409 = scalar_lea.sflag [#allocation6], %s408
        %s410 = sand.u32 %s90, 1
        %s411 = smul.addr %s410, 4
        %s412 = scalar_lea.vmem [#allocation7], %s411
        %p413 = pneg %p103
        %p414 = pneg %p100
        %p415 = pneg %p124
        %p416 = pneg %p121
        %p417 = pneg %p145
        %p418 = pneg %p142
        %p419 = pneg %p166
        %p420 = pneg %p163
        %p421 = pneg %p187
        %p422 = pneg %p184
        %p423 = pneg %p208
        %p424 = pneg %p205
        %p425 = pneg %p229
        %p426 = pneg %p226
        %p427 = pneg %p255
        %p428 = pneg %p252
        %s429 = sand.u32 %s242, 1
        %s430 = scalar_lea.sflag [#allocation4], %s429
        %s431 = sand.u32 %s242, 1
        %s432 = smul.addr %s431, 8
        %s433 = scalar_lea.vmem [#allocation10], %s432
        %v435 = vld [vmem:[%s367] sm:$0xf]
        %v436 = vld [vmem:[%s376] sm:$0xf]
        %v437 = vld [vmem:[%s385] sm:$0xf]
        %v438 = vld [vmem:[#allocation8] sm:$0xf]
        %v439 = vld [vmem:[#allocation8 + $0x4] sm:$0xf]
        %v440 = vld [vmem:[%s4] sm:$0x1]
        %v442 = vlaneseq
        %v443 = vshrl.u32 %v442, 7
        %v444 = vsub.s32 0, %v443
        %v445 = vrot.slane %v440, %v444
        %v449 = vunpack.c.l.b16 %v438
        %v450 = vunpack.c.l.b16 %v439
        %v451 = vpack.c.b16 %v450, %v449
        %vm453 = vcmask 130048
        %v455 = vsel %vm453, %v436, 0
        %457 = vmatprep.subr.bf16.mxu0 0
        %458 = vmatpush1.bf16.msra.mxu0 %v451
        %459 = vmatprep.subr.bf16.mxu0 0
        %460 = vmatpush1.bf16.msra.mxu0 0
        %461 = vmatprep.subr.bf16.mxu0 0
        %462 = vmatpush1.bf16.msra.mxu0 0
        %463 = vmatprep.subr.bf16.mxu0 0
        %464 = vmatpush1.bf16.msra.mxu0 0
        %465 = vmatprep.subr.bf16.mxu0 0
        %466 = vmatpush1.bf16.msra.mxu0 0
        %467 = vmatprep.subr.bf16.mxu0 0
        %468 = vmatpush1.bf16.msra.mxu0 0
        %469 = vmatprep.subr.bf16.mxu0 0
        %470 = vmatpush1.bf16.msra.mxu0 0
        %471 = vmatprep.subr.bf16.mxu0 0
        %472 = vmatpush1.bf16.msra.mxu0 0
        %473 = vmatprep.subr.bf16.mxu0 0
        %474 = vmatpush1.bf16.msra.mxu0 0
        %475 = vmatprep.subr.bf16.mxu0 0
        %476 = vmatpush1.bf16.msra.mxu0 0
        %477 = vmatprep.subr.bf16.mxu0 0
        %478 = vmatpush1.bf16.msra.mxu0 0
        %479 = vmatprep.subr.bf16.mxu0 0
        %480 = vmatpush1.bf16.msra.mxu0 0
        %481 = vmatprep.subr.bf16.mxu0 0
        %482 = vmatpush1.bf16.msra.mxu0 0
        %483 = vmatprep.subr.bf16.mxu0 0
        %484 = vmatpush1.bf16.msra.mxu0 0
        %485 = vmatprep.subr.bf16.mxu0 0
        %486 = vmatpush1.bf16.msra.mxu0 0
        %487 = vmatprep.subr.bf16.mxu0 0
        %488 = vmatpush1.bf16.msra.mxu0 0
        %489 = vmatprep.mubr.bf16.mxu0 0
        %490 = vmatmul.mubr.bf16.gmra.mrb[0].mxu0 %v455
        %v491 = vpop.f32.mrb[0].mxu0
        %v492 = vadd.f32 %v445, %v491
        %v493 = vpop.f32.mrb[0].mxu0
        %v494 = vpop.f32.mrb[0].mxu0
        %v495 = vpop.f32.mrb[0].mxu0
        %496 = vdwg.mxu0
        %v497 = vld [vmem:[%s5] sm:$0xf]
        %v498 = vld [vmem:[%s5 + $0x4] sm:$0xf]
        %v499 = vld [vmem:[%s5 + $0x8] sm:$0xf]
        %v500 = vld [vmem:[%s5 + $0xc] sm:$0xf]
        %v501 = vld [vmem:[%s6] sm:$0x1]
        %v503 = vlaneseq
        %v504 = vshrl.u32 %v503, 7
        %v505 = vsub.s32 0, %v504
        %v506 = vrot.slane %v501, %v505
        %v512 = vunpack.c.l.b16 %v497
        %v513 = vunpack.c.l.b16 %v498
        %v514 = vunpack.c.l.b16 %v499
        %v515 = vunpack.c.l.b16 %v500
        %v516 = vpack.c.b16 %v513, %v512
        %v517 = vpack.c.b16 %v515, %v514
        %vm520 = vcmask 261120
        %v522 = vsel %vm520, %v437, 0
        %524 = vmatprep.subr.bf16.mxu0 0
        %525 = vmatpush1.bf16.msra.mxu0 %v516
        %526 = vmatprep.subr.bf16.mxu0 0
        %527 = vmatpush1.bf16.msra.mxu0 %v517
        %528 = vmatprep.subr.bf16.mxu0 0
        %529 = vmatpush1.bf16.msra.mxu0 0
        %530 = vmatprep.subr.bf16.mxu0 0
        %531 = vmatpush1.bf16.msra.mxu0 0
        %532 = vmatprep.subr.bf16.mxu0 0
        %533 = vmatpush1.bf16.msra.mxu0 0
        %534 = vmatprep.subr.bf16.mxu0 0
        %535 = vmatpush1.bf16.msra.mxu0 0
        %536 = vmatprep.subr.bf16.mxu0 0
        %537 = vmatpush1.bf16.msra.mxu0 0
        %538 = vmatprep.subr.bf16.mxu0 0
        %539 = vmatpush1.bf16.msra.mxu0 0
        %540 = vmatprep.subr.bf16.mxu0 0
        %541 = vmatpush1.bf16.msra.mxu0 0
        %542 = vmatprep.subr.bf16.mxu0 0
        %543 = vmatpush1.bf16.msra.mxu0 0
        %544 = vmatprep.subr.bf16.mxu0 0
        %545 = vmatpush1.bf16.msra.mxu0 0
        %546 = vmatprep.subr.bf16.mxu0 0
        %547 = vmatpush1.bf16.msra.mxu0 0
        %548 = vmatprep.subr.bf16.mxu0 0
        %549 = vmatpush1.bf16.msra.mxu0 0
        %550 = vmatprep.subr.bf16.mxu0 0
        %551 = vmatpush1.bf16.msra.mxu0 0
        %552 = vmatprep.subr.bf16.mxu0 0
        %553 = vmatpush1.bf16.msra.mxu0 0
        %554 = vmatprep.subr.bf16.mxu0 0
        %555 = vmatpush1.bf16.msra.mxu0 0
        %556 = vmatprep.mubr.bf16.mxu0 0
        %557 = vmatmul.mubr.bf16.gmra.mrb[0].mxu0 %v522
        %v558 = vpop.f32.mrb[0].mxu0
        %v559 = vadd.f32 %v506, %v558
        %v560 = vpop.f32.mrb[0].mxu0
        %v561 = vpop.f32.mrb[0].mxu0
        %v562 = vpop.f32.mrb[0].mxu0
        %563 = vdwg.mxu0
        %v564 = vmul.f32 %v559, 0.25
        %v565 = vld [vmem:[%s7] sm:$0xf]
        %v566 = vld [vmem:[%s7 + $0x4] sm:$0xf]
        %v569 = vunpack.c.l.b16 %v565
        %v570 = vunpack.c.l.b16 %v566
        %v571 = vpack.c.b16 %v570, %v569
        %v574 = vsel %vm453, %v435, 0
        %576 = vmatprep.subr.bf16.mxu0 0
        %577 = vmatpush1.bf16.msra.mxu0 %v571
        %578 = vmatprep.subr.bf16.mxu0 0
        %579 = vmatpush1.bf16.msra.mxu0 0
        %580 = vmatprep.subr.bf16.mxu0 0
        %581 = vmatpush1.bf16.msra.mxu0 0
        %582 = vmatprep.subr.bf16.mxu0 0
        %583 = vmatpush1.bf16.msra.mxu0 0
        %584 = vmatprep.subr.bf16.mxu0 0
        %585 = vmatpush1.bf16.msra.mxu0 0
        %586 = vmatprep.subr.bf16.mxu0 0
        %587 = vmatpush1.bf16.msra.mxu0 0
        %588 = vmatprep.subr.bf16.mxu0 0
        %589 = vmatpush1.bf16.msra.mxu0 0
        %590 = vmatprep.subr.bf16.mxu0 0
        %591 = vmatpush1.bf16.msra.mxu0 0
        %592 = vmatprep.subr.bf16.mxu0 0
        %593 = vmatpush1.bf16.msra.mxu0 0
        %594 = vmatprep.subr.bf16.mxu0 0
        %595 = vmatpush1.bf16.msra.mxu0 0
        %596 = vmatprep.subr.bf16.mxu0 0
        %597 = vmatpush1.bf16.msra.mxu0 0
        %598 = vmatprep.subr.bf16.mxu0 0
        %599 = vmatpush1.bf16.msra.mxu0 0
        %600 = vmatprep.subr.bf16.mxu0 0
        %601 = vmatpush1.bf16.msra.mxu0 0
        %602 = vmatprep.subr.bf16.mxu0 0
        %603 = vmatpush1.bf16.msra.mxu0 0
        %604 = vmatprep.subr.bf16.mxu0 0
        %605 = vmatpush1.bf16.msra.mxu0 0
        %606 = vmatprep.subr.bf16.mxu0 0
        %607 = vmatpush1.bf16.msra.mxu0 0
        %608 = vmatprep.mubr.bf16.mxu0 0
        %609 = vmatmul.mubr.bf16.gmra.mrb[0].mxu0 %v574
        %v610 = vpop.f32.mrb[0].mxu0
        %v611 = vadd.f32 0.0, %v610
        %v612 = vpop.f32.mrb[0].mxu0
        %v613 = vpop.f32.mrb[0].mxu0
        %v614 = vpop.f32.mrb[0].mxu0
        %615 = vdwg.mxu0
        %v616 = vpack.c.bf16 %v492, %v492
        %v617 = vpack.c.bf16 %v564, %v564
        %v618 = vpack.c.bf16 %v611, %v611
        %v620 = vsel %vm453, %v617, 0
        %v623 = vsel %vm453, %v616, 0
        %625 = vmatprep.subr.bf16.mxu0 0
        %626 = vmatpush1.bf16.xpose.msra.mxu0 %v623
        %627 = vmatprep.subr.bf16.mxu0 0
        %628 = vmatpush1.bf16.xpose.msra.mxu0 0
        %629 = vmatprep.subr.bf16.mxu0 0
        %630 = vmatpush1.bf16.xpose.msra.mxu0 0
        %631 = vmatprep.subr.bf16.mxu0 0
        %632 = vmatpush1.bf16.xpose.msra.mxu0 0
        %633 = vmatprep.subr.bf16.mxu0 0
        %634 = vmatpush1.bf16.xpose.msra.mxu0 0
        %635 = vmatprep.subr.bf16.mxu0 0
        %636 = vmatpush1.bf16.xpose.msra.mxu0 0
        %637 = vmatprep.subr.bf16.mxu0 0
        %638 = vmatpush1.bf16.xpose.msra.mxu0 0
        %639 = vmatprep.subr.bf16.mxu0 0
        %640 = vmatpush1.bf16.xpose.msra.mxu0 0
        %641 = vmatprep.subr.bf16.mxu0 0
        %642 = vmatpush1.bf16.xpose.msra.mxu0 0
        %643 = vmatprep.subr.bf16.mxu0 0
        %644 = vmatpush1.bf16.xpose.msra.mxu0 0
        %645 = vmatprep.subr.bf16.mxu0 0
        %646 = vmatpush1.bf16.xpose.msra.mxu0 0
        %647 = vmatprep.subr.bf16.mxu0 0
        %648 = vmatpush1.bf16.xpose.msra.mxu0 0
        %649 = vmatprep.subr.bf16.mxu0 0
        %650 = vmatpush1.bf16.xpose.msra.mxu0 0
        %651 = vmatprep.subr.bf16.mxu0 0
        %652 = vmatpush1.bf16.xpose.msra.mxu0 0
        %653 = vmatprep.subr.bf16.mxu0 0
        %654 = vmatpush1.bf16.xpose.msra.mxu0 0
        %655 = vmatprep.subr.bf16.mxu0 0
        %656 = vmatpush1.bf16.xpose.msra.mxu0 0
        %657 = vmatprep.mubr.bf16.mxu0 0
        %658 = vmatmul.mubr.bf16.gmra.mrb[0].mxu0 %v620
        %v659 = vpop.f32.mrb[0].mxu0
        %v660 = vadd.f32 0.0, %v659
        %v661 = vpop.f32.mrb[0].mxu0
        %v662 = vpop.f32.mrb[0].mxu0
        %v663 = vpop.f32.mrb[0].mxu0
        %664 = vdwg.mxu0
        %666 = vrot.lane.b32.xlu0 %v617, 112
        %v667 = vpop.permute.xlu0 %666
        %669 = vrot.lane.b32.xlu0 %v616, 112
        %v670 = vpop.permute.xlu0 %669
        %v672 = vsel %vm453, %v667, 0
        %v675 = vsel %vm453, %v670, 0
        %677 = vmatprep.subr.bf16.mxu0 0
        %678 = vmatpush1.bf16.xpose.msra.mxu0 %v675
        %679 = vmatprep.subr.bf16.mxu0 0
        %680 = vmatpush1.bf16.xpose.msra.mxu0 0
        %681 = vmatprep.subr.bf16.mxu0 0
        %682 = vmatpush1.bf16.xpose.msra.mxu0 0
        %683 = vmatprep.subr.bf16.mxu0 0
        %684 = vmatpush1.bf16.xpose.msra.mxu0 0
        %685 = vmatprep.subr.bf16.mxu0 0
        %686 = vmatpush1.bf16.xpose.msra.mxu0 0
        %687 = vmatprep.subr.bf16.mxu0 0
        %688 = vmatpush1.bf16.xpose.msra.mxu0 0
        %689 = vmatprep.subr.bf16.mxu0 0
        %690 = vmatpush1.bf16.xpose.msra.mxu0 0
        %691 = vmatprep.subr.bf16.mxu0 0
        %692 = vmatpush1.bf16.xpose.msra.mxu0 0
        %693 = vmatprep.subr.bf16.mxu0 0
        %694 = vmatpush1.bf16.xpose.msra.mxu0 0
        %695 = vmatprep.subr.bf16.mxu0 0
        %696 = vmatpush1.bf16.xpose.msra.mxu0 0
        %697 = vmatprep.subr.bf16.mxu0 0
        %698 = vmatpush1.bf16.xpose.msra.mxu0 0
        %699 = vmatprep.subr.bf16.mxu0 0
        %700 = vmatpush1.bf16.xpose.msra.mxu0 0
        %701 = vmatprep.subr.bf16.mxu0 0
        %702 = vmatpush1.bf16.xpose.msra.mxu0 0
        %703 = vmatprep.subr.bf16.mxu0 0
        %704 = vmatpush1.bf16.xpose.msra.mxu0 0
        %705 = vmatprep.subr.bf16.mxu0 0
        %706 = vmatpush1.bf16.xpose.msra.mxu0 0
        %707 = vmatprep.subr.bf16.mxu0 0
        %708 = vmatpush1.bf16.xpose.msra.mxu0 0
        %709 = vmatprep.mubr.bf16.mxu0 0
        %710 = vmatmul.mubr.bf16.gmra.mrb[0].mxu0 %v672
        %v711 = vpop.f32.mrb[0].mxu0
        %v712 = vadd.f32 0.0, %v711
        %v713 = vpop.f32.mrb[0].mxu0
        %v714 = vpop.f32.mrb[0].mxu0
        %v715 = vpop.f32.mrb[0].mxu0
        %716 = vdwg.mxu0
        %717 = vrot.lane.b32.xlu0 %v617, 96
        %v718 = vpop.permute.xlu0 %717
        %719 = vrot.lane.b32.xlu0 %v616, 96
        %v720 = vpop.permute.xlu0 %719
        %v722 = vsel %vm453, %v718, 0
        %v725 = vsel %vm453, %v720, 0
        %727 = vmatprep.subr.bf16.mxu0 0
        %728 = vmatpush1.bf16.xpose.msra.mxu0 %v725
        %729 = vmatprep.subr.bf16.mxu0 0
        %730 = vmatpush1.bf16.xpose.msra.mxu0 0
        %731 = vmatprep.subr.bf16.mxu0 0
        %732 = vmatpush1.bf16.xpose.msra.mxu0 0
        %733 = vmatprep.subr.bf16.mxu0 0
        %734 = vmatpush1.bf16.xpose.msra.mxu0 0
        %735 = vmatprep.subr.bf16.mxu0 0
        %736 = vmatpush1.bf16.xpose.msra.mxu0 0
        %737 = vmatprep.subr.bf16.mxu0 0
        %738 = vmatpush1.bf16.xpose.msra.mxu0 0
        %739 = vmatprep.subr.bf16.mxu0 0
        %740 = vmatpush1.bf16.xpose.msra.mxu0 0
        %741 = vmatprep.subr.bf16.mxu0 0
        %742 = vmatpush1.bf16.xpose.msra.mxu0 0
        %743 = vmatprep.subr.bf16.mxu0 0
        %744 = vmatpush1.bf16.xpose.msra.mxu0 0
        %745 = vmatprep.subr.bf16.mxu0 0
        %746 = vmatpush1.bf16.xpose.msra.mxu0 0
        %747 = vmatprep.subr.bf16.mxu0 0
        %748 = vmatpush1.bf16.xpose.msra.mxu0 0
        %749 = vmatprep.subr.bf16.mxu0 0
        %750 = vmatpush1.bf16.xpose.msra.mxu0 0
        %751 = vmatprep.subr.bf16.mxu0 0
        %752 = vmatpush1.bf16.xpose.msra.mxu0 0
        %753 = vmatprep.subr.bf16.mxu0 0
        %754 = vmatpush1.bf16.xpose.msra.mxu0 0
        %755 = vmatprep.subr.bf16.mxu0 0
        %756 = vmatpush1.bf16.xpose.msra.mxu0 0
        %757 = vmatprep.subr.bf16.mxu0 0
        %758 = vmatpush1.bf16.xpose.msra.mxu0 0
        %759 = vmatprep.mubr.bf16.mxu0 0
        %760 = vmatmul.mubr.bf16.gmra.mrb[0].mxu0 %v722
        %v761 = vpop.f32.mrb[0].mxu0
        %v762 = vadd.f32 0.0, %v761
        %v763 = vpop.f32.mrb[0].mxu0
        %v764 = vpop.f32.mrb[0].mxu0
        %v765 = vpop.f32.mrb[0].mxu0
        %766 = vdwg.mxu0
        %v767 = vmax.f32 %v660, %v712
        %v768 = vmax.f32 %v767, %v762
        %v769 = vsub.f32 %v660, %v768
        %v770 = vmul.f32 %v769, 1.442695
        %v771 = vpow.pop %v770
        %v772 = vsub.f32 %v712, %v768
        %v773 = vmul.f32 %v772, 1.442695
        %v774 = vpow.pop %v773
        %v775 = vadd.f32 %v771, %v774
        %v776 = vsub.f32 %v762, %v768
        %v777 = vmul.f32 %v776, 1.442695
        %v778 = vpow.pop %v777
        %v779 = vadd.f32 %v775, %v778
        %v780 = vrcp.pop %v779
        %v781 = vmul.f32 %v771, %v780
        %v782 = vpack.c.bf16 %v781, %v781
        %v783 = vmul.f32 %v774, %v780
        %v784 = vpack.c.bf16 %v783, %v783
        %786 = vrot.lane.b32.xlu0 %v618, 96
        %v787 = vpop.permute.xlu0 %786
        %vm788 = vcmask 64512
        %v790 = vsel %vm788, %v784, 0
        %vm792 = vcmask 1043456
        %v794 = vsel %vm792, %v787, 0
        %796 = vmatprep.subr.bf16.mxu0 0
        %797 = vmatpush1.bf16.msra.mxu0 %v794
        %798 = vmatprep.subr.bf16.mxu0 0
        %799 = vmatpush1.bf16.msra.mxu0 0
        %800 = vmatprep.subr.bf16.mxu0 0
        %801 = vmatpush1.bf16.msra.mxu0 0
        %802 = vmatprep.subr.bf16.mxu0 0
        %803 = vmatpush1.bf16.msra.mxu0 0
        %804 = vmatprep.subr.bf16.mxu0 0
        %805 = vmatpush1.bf16.msra.mxu0 0
        %806 = vmatprep.subr.bf16.mxu0 0
        %807 = vmatpush1.bf16.msra.mxu0 0
        %808 = vmatprep.subr.bf16.mxu0 0
        %809 = vmatpush1.bf16.msra.mxu0 0
        %810 = vmatprep.subr.bf16.mxu0 0
        %811 = vmatpush1.bf16.msra.mxu0 0
        %812 = vmatprep.subr.bf16.mxu0 0
        %813 = vmatpush1.bf16.msra.mxu0 0
        %814 = vmatprep.subr.bf16.mxu0 0
        %815 = vmatpush1.bf16.msra.mxu0 0
        %816 = vmatprep.subr.bf16.mxu0 0
        %817 = vmatpush1.bf16.msra.mxu0 0
        %818 = vmatprep.subr.bf16.mxu0 0
        %819 = vmatpush1.bf16.msra.mxu0 0
        %820 = vmatprep.subr.bf16.mxu0 0
        %821 = vmatpush1.bf16.msra.mxu0 0
        %822 = vmatprep.subr.bf16.mxu0 0
        %823 = vmatpush1.bf16.msra.mxu0 0
        %824 = vmatprep.subr.bf16.mxu0 0
        %825 = vmatpush1.bf16.msra.mxu0 0
        %826 = vmatprep.subr.bf16.mxu0 0
        %827 = vmatpush1.bf16.msra.mxu0 0
        %828 = vmatprep.mubr.bf16.mxu0 0
        %829 = vmatmul.mubr.bf16.gmra.mrb[0].mxu0 %v790
        %v830 = vpop.f32.mrb[0].mxu0
        %v831 = vadd.f32 0.0, %v830
        %v832 = vpop.f32.mrb[0].mxu0
        %v833 = vpop.f32.mrb[0].mxu0
        %v834 = vpop.f32.mrb[0].mxu0
        %835 = vdwg.mxu0
        %v837 = vsel %vm788, %v782, 0
        %v840 = vsel %vm792, %v618, 0
        %842 = vmatprep.subr.bf16.mxu0 0
        %843 = vmatpush1.bf16.msra.mxu0 %v840
        %844 = vmatprep.subr.bf16.mxu0 0
        %845 = vmatpush1.bf16.msra.mxu0 0
        %846 = vmatprep.subr.bf16.mxu0 0
        %847 = vmatpush1.bf16.msra.mxu0 0
        %848 = vmatprep.subr.bf16.mxu0 0
        %849 = vmatpush1.bf16.msra.mxu0 0
        %850 = vmatprep.subr.bf16.mxu0 0
        %851 = vmatpush1.bf16.msra.mxu0 0
        %852 = vmatprep.subr.bf16.mxu0 0
        %853 = vmatpush1.bf16.msra.mxu0 0
        %854 = vmatprep.subr.bf16.mxu0 0
        %855 = vmatpush1.bf16.msra.mxu0 0
        %856 = vmatprep.subr.bf16.mxu0 0
        %857 = vmatpush1.bf16.msra.mxu0 0
        %858 = vmatprep.subr.bf16.mxu0 0
        %859 = vmatpush1.bf16.msra.mxu0 0
        %860 = vmatprep.subr.bf16.mxu0 0
        %861 = vmatpush1.bf16.msra.mxu0 0
        %862 = vmatprep.subr.bf16.mxu0 0
        %863 = vmatpush1.bf16.msra.mxu0 0
        %864 = vmatprep.subr.bf16.mxu0 0
        %865 = vmatpush1.bf16.msra.mxu0 0
        %866 = vmatprep.subr.bf16.mxu0 0
        %867 = vmatpush1.bf16.msra.mxu0 0
        %868 = vmatprep.subr.bf16.mxu0 0
        %869 = vmatpush1.bf16.msra.mxu0 0
        %870 = vmatprep.subr.bf16.mxu0 0
        %871 = vmatpush1.bf16.msra.mxu0 0
        %872 = vmatprep.subr.bf16.mxu0 0
        %873 = vmatpush1.bf16.msra.mxu0 0
        %874 = vmatprep.mubr.bf16.mxu0 0
        %875 = vmatmul.mubr.bf16.gmra.mrb[0].mxu0 %v837
        %v876 = vpop.f32.mrb[0].mxu0
        %v877 = vadd.f32 %v831, %v876
        %v878 = vpop.f32.mrb[0].mxu0
        %v879 = vpop.f32.mrb[0].mxu0
        %v880 = vpop.f32.mrb[0].mxu0
        %881 = vdwg.mxu0
        %v882 = vmul.f32 %v778, %v780
        %v883 = vpack.c.bf16 %v882, %v882
        %884 = vrot.lane.b32.xlu0 %v618, 64
        %v885 = vpop.permute.xlu0 %884
        %v887 = vsel %vm788, %v883, 0
        %v890 = vsel %vm792, %v885, 0
        %892 = vmatprep.subr.bf16.mxu0 0
        %893 = vmatpush1.bf16.msra.mxu0 %v890
        %894 = vmatprep.subr.bf16.mxu0 0
        %895 = vmatpush1.bf16.msra.mxu0 0
        %896 = vmatprep.subr.bf16.mxu0 0
        %897 = vmatpush1.bf16.msra.mxu0 0
        %898 = vmatprep.subr.bf16.mxu0 0
        %899 = vmatpush1.bf16.msra.mxu0 0
        %900 = vmatprep.subr.bf16.mxu0 0
        %901 = vmatpush1.bf16.msra.mxu0 0
        %902 = vmatprep.subr.bf16.mxu0 0
        %903 = vmatpush1.bf16.msra.mxu0 0
        %904 = vmatprep.subr.bf16.mxu0 0
        %905 = vmatpush1.bf16.msra.mxu0 0
        %906 = vmatprep.subr.bf16.mxu0 0
        %907 = vmatpush1.bf16.msra.mxu0 0
        %908 = vmatprep.subr.bf16.mxu0 0
        %909 = vmatpush1.bf16.msra.mxu0 0
        %910 = vmatprep.subr.bf16.mxu0 0
        %911 = vmatpush1.bf16.msra.mxu0 0
        %912 = vmatprep.subr.bf16.mxu0 0
        %913 = vmatpush1.bf16.msra.mxu0 0
        %914 = vmatprep.subr.bf16.mxu0 0
        %915 = vmatpush1.bf16.msra.mxu0 0
        %916 = vmatprep.subr.bf16.mxu0 0
        %917 = vmatpush1.bf16.msra.mxu0 0
        %918 = vmatprep.subr.bf16.mxu0 0
        %919 = vmatpush1.bf16.msra.mxu0 0
        %920 = vmatprep.subr.bf16.mxu0 0
        %921 = vmatpush1.bf16.msra.mxu0 0
        %922 = vmatprep.subr.bf16.mxu0 0
        %923 = vmatpush1.bf16.msra.mxu0 0
        %924 = vmatprep.mubr.bf16.mxu0 0
        %925 = vmatmul.mubr.bf16.gmra.mrb[0].mxu0 %v887
        %v926 = vpop.f32.mrb[0].mxu0
        %v927 = vadd.f32 0.0, %v926
        %v928 = vpop.f32.mrb[0].mxu0
        %v929 = vpop.f32.mrb[0].mxu0
        %v930 = vpop.f32.mrb[0].mxu0
        %931 = vdwg.mxu0
        %v932 = vadd.f32 %v877, %v927
        %v933 = vld [vmem:[%s8] sm:$0x1]
        %v935 = vlaneseq
        %v936 = vshrl.u32 %v935, 7
        %v937 = vsub.s32 0, %v936
        %v938 = vrot.slane %v933, %v937
        %v940 = vadd.f32 %v932, %v938
        %v941 = vmax.f32 %v940, 0.0
        %942 = vst.msk [vmem:[%s433] sm:$0xff] %vm520, %v941
        %s943 = sand.u32 %s242, 1
        %s944 = scalar_lea.sflag [#allocation4], %s943
        %s945 = sand.u32 %s242, 1
        %s946 = smul.addr %s945, 8
        %s947 = scalar_lea.vmem [#allocation10], %s946
        // Predicated region
        $region73: #{tpu_custom_call.1} parent=55 // pred_check
          %p948 = pneg %p252
        $region74: #{tpu_custom_call.1} parent=55 // pred_check_branch
          %950 = sbr.rel (%p948) target = $region76
        $region75: #{tpu_custom_call.1} parent=55 // pred_region
          %s952 = ssub.s32 128, 128
          %953 = vsyncadd %s944, %s952
          %s954 = smul.addr %s30, 128
          %s955 = scalar_lea.hbm %s9, %s954
          %s957 = sshll.u32 %s947, 4
          %s958 = int_to_ptr.vmem [resolvable:$true] %s957
          %960 = dma.vmem_to_hbm [thread:$0]  %s958, 128, %s955, %s944
        $region76: #{tpu_custom_call.1} parent=55 // pred_fallthru
          _
      $region56: #{tpu_custom_call.1} parent=5 // pred_fallthru
        _
      %p961 = scmp.le.s32.totalorder 2, %s25
      // Predicated region
      $region77: #{tpu_custom_call.1} parent=5 // pred_check
        %p962 = pneg %p961
      $region78: #{tpu_custom_call.1} parent=5 // pred_check_branch
        %964 = sbr.rel (%p962) target = $region80
      $region79: #{tpu_custom_call.1} parent=5 // pred_region
        %s965 = ssub.s32 %s25, 2
        // Predicated region
        $region81: #{tpu_custom_call.1} parent=79 // pred_check
          %p966 = pneg %p258
        $region82: #{tpu_custom_call.1} parent=79 // pred_check_branch
          %968 = sbr.rel (%p966) target = $region84
        $region83: #{tpu_custom_call.1} parent=79 // pred_region
          %s969 = sand.u32 %s243, 1
          %s970 = scalar_lea.sflag [#allocation4], %s969
          %s971 = sand.u32 %s243, 1
          %s972 = smul.addr %s971, 8
          %s973 = scalar_lea.vmem [#allocation10], %s972
          %974 = dma.done %s970, 128
        $region84: #{tpu_custom_call.1} parent=79 // pred_fallthru
          _
      $region80: #{tpu_custom_call.1} parent=5 // pred_fallthru
        _
    $region6: #{tpu_custom_call.1} parent=1 // loop_footer
      %s29 = sadd.s32 1, %s25
    $region7: #{tpu_custom_call.1} parent=1 // loop_footer_branch
      %24 = sbr.rel target = $region3
    $region8: #{tpu_custom_call.1} parent=1 // loop_exit
      _
    %975 = vsyncpa [#allocation3], 1
    %s976 = scalar_lea.sflag [#allocation3], 1
    %977 = vsyncpa %s976, 1
    %978 = vsyncpa [#allocation6], 1
    %s979 = scalar_lea.sflag [#allocation6], 1
    %980 = vsyncpa %s979, 1
    %981 = vsyncpa [#allocation9], 1
    %982 = vsyncpa [#allocation4], 1
    %s983 = scalar_lea.sflag [#allocation4], 1
    %984 = vsyncpa %s983, 1

</llo_original>
